<compile_context>
chip_gen: v5e
topology: v5e:2x2
jax: 0.10.0
libtpu: 0.0.40
codegen_flags: <defaults>
</compile_context>

<pallas_src>
import jax
import jax.numpy as jnp
import numpy as np
from jax import lax
from jax.experimental import pallas as pl
from jax.experimental.pallas import tpu as pltpu


def _bag_embed_linear_kernel(idx_ref, len_ref, emb_ref, w_ref, b_ref, out_ref):
    idx = idx_ref[...]                             # (B, L) int32, zero-padded
    lens = len_ref[...].astype(jnp.float32)        # (B, 1)
    B, L = idx.shape
    V = emb_ref.shape[0]

    # counts[b, v] = #{l : idx[b, l] == v} over the zero-padded index matrix,
    # then subtract the padding contribution from column 0 only (2-D fix-up
    # instead of a (B, L, V) validity mask).
    vocab_iota = lax.broadcasted_iota(jnp.int32, (B, L, V), 2)
    counts = jnp.sum((idx[:, :, None] == vocab_iota).astype(jnp.float32),
                     axis=1)                                        # (B, V)
    pad_cnt = jnp.float32(L) - lens                                 # (B, 1)
    col0 = lax.broadcasted_iota(jnp.int32, (B, V), 1) == 0
    counts = counts - jnp.where(col0, pad_cnt, 0.0)

    # Sum of embeddings per bag as a bf16 MXU matmul with f32 accumulation.
    summed = jnp.dot(counts.astype(jnp.bfloat16), emb_ref[...],
                     preferred_element_type=jnp.float32)            # (B, H)

    # Mean pooling (reciprocal on the EUP slot), zeros for empty bags.
    inv_len = pl.reciprocal(jnp.maximum(lens, 1.0), approx=True)
    pooled = jnp.where(lens > 0.0, summed * inv_len, 0.0)

    # tanh + Linear into a lane-dense (B, 128) output tile.
    h = jnp.tanh(pooled).astype(jnp.bfloat16)
    out_ref[...] = (
        jnp.dot(h, w_ref[...], preferred_element_type=jnp.float32) + b_ref[...]
    )


def model_forward(lengths, indices, emb, weight, bias, max_len):
    """lengths: (B,) int; indices: (total,) int; emb: (V, H);
    weight: (C, H) (PyTorch Linear layout); bias: (C,).
    NOTE: requires max_len >= max(lengths); longer bags would be truncated."""
    B = lengths.shape[0]
    H = emb.shape[1]
    C = weight.shape[0]
    C_pad = ((C + 127) // 128) * 128               # lane-dense output width

    # Glue: ragged indices -> zero-padded (B, max_len) matrix (plain JAX; the
    # ragged layout is not expressible with a BlockSpec).
    lengths = lengths.astype(jnp.int32)
    starts = jnp.cumsum(lengths) - lengths                           # (B,)
    pos = jnp.arange(max_len, dtype=jnp.int32)
    gidx = jnp.clip(starts[:, None] + pos[None, :], 0, indices.shape[0] - 1)
    padded = jnp.where(pos[None, :] < lengths[:, None],
                       indices[gidx], 0).astype(jnp.int32)           # (B, L)
    lens2 = lengths.reshape(B, 1)                                    # (B, 1)

    # bf16 MXU operands; zero-pad the output-feature dim to a multiple of 128.
    emb_bf = emb.astype(jnp.bfloat16)                                # (V, H)
    w_pad = jnp.zeros((H, C_pad), jnp.bfloat16).at[:, :C].set(
        weight.T.astype(jnp.bfloat16))                               # (H, 128)
    b_pad = jnp.zeros((1, C_pad), jnp.float32).at[:, :C].set(
        bias.astype(jnp.float32))                                    # (1, 128)

    vmem = pltpu.MemorySpace.VMEM
    out = pl.pallas_call(
        _bag_embed_linear_kernel,
        out_shape=jax.ShapeDtypeStruct((B, C_pad), jnp.float32),
        in_specs=[pl.BlockSpec(memory_space=vmem)] * 5,
        out_specs=pl.BlockSpec(memory_space=vmem),
    )(padded, lens2, emb_bf, w_pad, b_pad)
    return out[:, :C]


def _reference_forward(lengths, indices, emb, weight, bias):
    lengths = np.asarray(lengths)
    indices = np.asarray(indices)
    emb = np.asarray(emb)
    starts = np.cumsum(lengths) - lengths
    rows = []
    for i, l in enumerate(lengths):
        if l > 0:
            s = starts[i]
            rows.append(emb[indices[s:s + l]].sum(axis=0) / l)
        else:
            rows.append(np.zeros(emb.shape[1], np.float32))
    h = np.tanh(np.stack(rows).astype(np.float32))
    return h @ np.asarray(weight).T + np.asarray(bias)


if __name__ == "__main__":
    # Small shapes consistent with the module: ntoken=64, nhid=32, nclasses=14.
    ntoken, nhid, nclasses = 64, 32, 14
    B, max_len = 8, 8

    key = jax.random.PRNGKey(0)
    k_emb, k_w, k_b, k_idx = jax.random.split(key, 4)

    emb_table = jax.random.normal(k_emb, (ntoken, nhid), jnp.float32) * 0.1
    lin_w = jax.random.normal(k_w, (nclasses, nhid), jnp.float32) * 0.1
    lin_b = jax.random.normal(k_b, (nclasses,), jnp.float32) * 0.1

    # Ragged bags: one empty bag, rest variable length (<= max_len).
    lengths = jnp.array([3, 0, 5, 2, 8, 1, 4, 6], dtype=jnp.int32)
    assert int(jnp.max(lengths)) <= max_len
    total = int(jnp.sum(lengths))
    indices = jax.random.randint(k_idx, (total,), 0, ntoken, dtype=jnp.int32)

    out = model_forward(lengths, indices, emb_table, lin_w, lin_b, max_len)
    out = jax.block_until_ready(out)

    ref = _reference_forward(lengths, indices, emb_table, lin_w, lin_b)
    assert out.shape == (B, nclasses)
    # bf16 MXU operands + approx reciprocal -> slightly looser tolerance.
    assert np.allclose(np.asarray(out), ref, atol=5e-3, rtol=1e-2), (
        f"max abs diff {np.max(np.abs(np.asarray(out) - ref))}")

    print("KERNEL_OK")
</pallas_src>

<mosaic_0001>
module attributes {stable_mosaic.version = 11 : i64} {
  func.func @_bag_embed_linear_kernel(%arg0: memref<8x8xi32, #tpu.memory_space<vmem>>, %arg1: memref<8x1xi32, #tpu.memory_space<vmem>>, %arg2: memref<64x32xbf16, #tpu.memory_space<vmem>>, %arg3: memref<32x128xbf16, #tpu.memory_space<vmem>>, %arg4: memref<1x128xf32, #tpu.memory_space<vmem>>, %arg5: memref<8x128xf32, #tpu.memory_space<vmem>>) attributes {dimension_semantics = [], scalar_prefetch = 0 : i64, scratch_operands = 0 : i64, tpu.core_type = #tpu.core_type<tc>} {
    %c0 = arith.constant 0 : index
    %c0_0 = arith.constant 0 : index
    %0 = vector.load %arg0[%c0, %c0_0] : memref<8x8xi32, #tpu.memory_space<vmem>>, vector<8x8xi32>
    %c0_1 = arith.constant 0 : index
    %c0_2 = arith.constant 0 : index
    %1 = vector.load %arg1[%c0_1, %c0_2] : memref<8x1xi32, #tpu.memory_space<vmem>>, vector<8x1xi32>
    %2 = arith.sitofp %1 : vector<8x1xi32> to vector<8x1xf32>
    %3 = tpu.iota {dimensions = array<i32: 2>} : vector<8x8x64xi32>
    %4 = vector.shape_cast %0 : vector<8x8xi32> to vector<8x8x1xi32>
    %5 = vector.broadcast %4 : vector<8x8x1xi32> to vector<8x8x64xi32>
    %6 = arith.cmpi eq, %5, %3 : vector<8x8x64xi32>
    %7 = arith.extui %6 : vector<8x8x64xi1> to vector<8x8x64xi32>
    %8 = arith.sitofp %7 : vector<8x8x64xi32> to vector<8x8x64xf32>
    %cst = arith.constant dense<0.000000e+00> : vector<8x64xf32>
    %9 = vector.multi_reduction <add>, %8, %cst [1] : vector<8x8x64xf32> to vector<8x64xf32>
    %cst_3 = arith.constant 8.000000e+00 : f32
    %10 = vector.broadcast %cst_3 : f32 to vector<8x1xf32>
    %11 = arith.subf %10, %2 : vector<8x1xf32>
    %12 = tpu.iota {dimensions = array<i32: 1>} : vector<8x64xi32>
    %c0_i32 = arith.constant 0 : i32
    %13 = vector.broadcast %c0_i32 : i32 to vector<8x64xi32>
    %14 = arith.cmpi eq, %12, %13 : vector<8x64xi32>
    %cst_4 = arith.constant 0.000000e+00 : f32
    %15 = vector.shape_cast %11 : vector<8x1xf32> to vector<8x1xf32>
    %16 = vector.broadcast %15 : vector<8x1xf32> to vector<8x64xf32>
    %17 = vector.broadcast %cst_4 : f32 to vector<8x64xf32>
    %18 = arith.select %14, %16, %17 : vector<8x64xi1>, vector<8x64xf32>
    %19 = arith.subf %9, %18 : vector<8x64xf32>
    %20 = arith.truncf %19 : vector<8x64xf32> to vector<8x64xbf16>
    %c0_5 = arith.constant 0 : index
    %c0_6 = arith.constant 0 : index
    %21 = vector.load %arg2[%c0_5, %c0_6] : memref<64x32xbf16, #tpu.memory_space<vmem>>, vector<64x32xbf16>
    %cst_7 = arith.constant dense<0.000000e+00> : vector<8x32xf32>
    %22 = tpu.matmul %20, %21, %cst_7 {dimension_numbers = #tpu.dot_dimension_numbers<[1], [0], [0], [1], [0, 0, 1, 1], [], []>} : vector<8x64xbf16>, vector<64x32xbf16>, vector<8x32xf32> -> vector<8x32xf32>
    %cst_8 = arith.constant 1.000000e+00 : f32
    %23 = vector.broadcast %cst_8 : f32 to vector<8x1xf32>
    %24 = arith.maximumf %2, %23 : vector<8x1xf32>
    %25 = tpu.reciprocal %24 {approx = true} : vector<8x1xf32> -> vector<8x1xf32>
    %cst_9 = arith.constant 0.000000e+00 : f32
    %26 = vector.broadcast %cst_9 : f32 to vector<8x1xf32>
    %27 = arith.cmpf ogt, %2, %26 : vector<8x1xf32>
    %28 = vector.broadcast %25 : vector<8x1xf32> to vector<8x32xf32>
    %29 = arith.mulf %22, %28 : vector<8x32xf32>
    %cst_10 = arith.constant 0.000000e+00 : f32
    %30 = vector.shape_cast %27 : vector<8x1xi1> to vector<8x1xi1>
    %31 = vector.broadcast %30 : vector<8x1xi1> to vector<8x32xi1>
    %32 = vector.broadcast %cst_10 : f32 to vector<8x32xf32>
    %33 = arith.select %31, %29, %32 : vector<8x32xi1>, vector<8x32xf32>
    %34 = math.tanh %33 : vector<8x32xf32>
    %35 = arith.truncf %34 : vector<8x32xf32> to vector<8x32xbf16>
    %c0_11 = arith.constant 0 : index
    %c0_12 = arith.constant 0 : index
    %36 = vector.load %arg3[%c0_11, %c0_12] : memref<32x128xbf16, #tpu.memory_space<vmem>>, vector<32x128xbf16>
    %cst_13 = arith.constant dense<0.000000e+00> : vector<8x128xf32>
    %37 = tpu.matmul %35, %36, %cst_13 {dimension_numbers = #tpu.dot_dimension_numbers<[1], [0], [0], [1], [0, 0, 1, 1], [], []>} : vector<8x32xbf16>, vector<32x128xbf16>, vector<8x128xf32> -> vector<8x128xf32>
    %c0_14 = arith.constant 0 : index
    %c0_15 = arith.constant 0 : index
    %38 = vector.load %arg4[%c0_14, %c0_15] : memref<1x128xf32, #tpu.memory_space<vmem>>, vector<1x128xf32>
    %39 = vector.broadcast %38 : vector<1x128xf32> to vector<8x128xf32>
    %40 = arith.addf %37, %39 : vector<8x128xf32>
    %c0_16 = arith.constant 0 : index
    %c0_17 = arith.constant 0 : index
    %41 = vector.load %arg5[%c0_16, %c0_17] : memref<8x128xf32, #tpu.memory_space<vmem>>, vector<8x128xf32>
    tpu.vector_store %arg5[%c0_16, %c0_17], %40 {strides = array<i32>} : memref<8x128xf32, #tpu.memory_space<vmem>>, vector<8x128xf32>,
    return
  }
}

</mosaic_0001>

<llo_original>
// kernel: tpu_custom_call.1
$region0: #{tpu_custom_call.1}
  #allocation0 [shape = 'u32[]', space=smem, size = 0x4, offset = 0x4, fixed_abs, tag = 'smem constant byte address 0x4 - core index']
  #allocation1 [shape = 'u32[72,128]{1,0:T(1,128)}', space=vmem, size = 0x9000, scoped, tag = 'internal scratch']
  %s0 = inlined_call_operand.vmem [shape: s32[8,8], index: 0, kind: input, shape index: {}]
  %s1 = inlined_call_operand.vmem [shape: s32[8,1], index: 1, kind: input, shape index: {}]
  %s2 = inlined_call_operand.vmem [shape: bf16[64,32], index: 2, kind: input, shape index: {}]
  %s3 = inlined_call_operand.vmem [shape: bf16[32,128], index: 3, kind: input, shape index: {}]
  %s4 = inlined_call_operand.vmem [shape: f32[1,128], index: 4, kind: input, shape index: {}]
  %s5 = inlined_call_operand.hbm [shape: f32[8,128], index: 5, kind: output, shape index: {}]
  %s6 = sld [smem:[#allocation0]]
  $region30: #{tpu_custom_call.1} parent=0
    _
  %s8 = ssub.s32 1, %s6
  %s9 = scalar_select 0, %s8, %s6
  $region1: #{tpu_custom_call.1} parent=0
    #allocation2 [shape = 'u8[4096]{0}', space=vmem, size = 0x1000, scoped, tag = 'output window, operand 0, single buffered']
    #allocation3 [shape = 's32[1]{0}', space=sflag, size = 0x4, scoped, tag = 'scoped memory for tpu_custom_call.1']
    %10 = vsyncpa [#allocation3], 0
    // Predicated region
    $region2: #{tpu_custom_call.1} parent=1 // pred_check
      _
    $region3: #{tpu_custom_call.1} parent=1 // pred_check_branch
      %12 = sbr.rel (0) target = $region5
    $region4: #{tpu_custom_call.1} parent=1 // pred_region
      _
    $region5: #{tpu_custom_call.1} parent=1 // pred_fallthru
      _
    // Predicated region
    $region6: #{tpu_custom_call.1} parent=1 // pred_check
      _
    $region7: #{tpu_custom_call.1} parent=1 // pred_check_branch
      %14 = sbr.rel (0) target = $region9
    $region8: #{tpu_custom_call.1} parent=1 // pred_region
      _
    $region9: #{tpu_custom_call.1} parent=1 // pred_fallthru
      _
    // Predicated region
    $region10: #{tpu_custom_call.1} parent=1 // pred_check
      _
    $region11: #{tpu_custom_call.1} parent=1 // pred_check_branch
      %16 = sbr.rel (0) target = $region13
    $region12: #{tpu_custom_call.1} parent=1 // pred_region
      _
    $region13: #{tpu_custom_call.1} parent=1 // pred_fallthru
      _
    // Predicated region
    $region14: #{tpu_custom_call.1} parent=1 // pred_check
      _
    $region15: #{tpu_custom_call.1} parent=1 // pred_check_branch
      %18 = sbr.rel (0) target = $region17
    $region16: #{tpu_custom_call.1} parent=1 // pred_region
      _
    $region17: #{tpu_custom_call.1} parent=1 // pred_fallthru
      _
    // Predicated region
    $region18: #{tpu_custom_call.1} parent=1 // pred_check
      _
    $region19: #{tpu_custom_call.1} parent=1 // pred_check_branch
      %20 = sbr.rel (0) target = $region21
    $region20: #{tpu_custom_call.1} parent=1 // pred_region
      _
    $region21: #{tpu_custom_call.1} parent=1 // pred_fallthru
      _
    %v22 = vld [vmem:[%s0] sm:$0xff]
    %v23 = vld [vmem:[%s1] sm:$0xff]
    %v24 = vcvt.s32.f32 %v23
    %v25 = vlaneseq
    %v26 = vand.u32 %v25, 127
    %v27 = vperm.slane %v22, 0
    %v28 = vlaneseq
    %v29 = vshrl.u32 %v28, 7
    %31 = vset.pattern.permute.xlu0 %v29
    %32 = vperm.xlu0 %31, %v27
    %v33 = vpop.permute.xlu0 %32
    %v34 = vperm.slane %v22, 1
    %v35 = vlaneseq
    %v36 = vshrl.u32 %v35, 7
    %38 = vset.pattern.permute.xlu0 %v36
    %39 = vperm.xlu0 %38, %v34
    %v40 = vpop.permute.xlu0 %39
    %v41 = vperm.slane %v22, 2
    %v42 = vlaneseq
    %v43 = vshrl.u32 %v42, 7
    %45 = vset.pattern.permute.xlu0 %v43
    %46 = vperm.xlu0 %45, %v41
    %v47 = vpop.permute.xlu0 %46
    %v48 = vperm.slane %v22, 3
    %v49 = vlaneseq
    %v50 = vshrl.u32 %v49, 7
    %52 = vset.pattern.permute.xlu0 %v50
    %53 = vperm.xlu0 %52, %v48
    %v54 = vpop.permute.xlu0 %53
    %v55 = vperm.slane %v22, 4
    %v56 = vlaneseq
    %v57 = vshrl.u32 %v56, 7
    %59 = vset.pattern.permute.xlu0 %v57
    %60 = vperm.xlu0 %59, %v55
    %v61 = vpop.permute.xlu0 %60
    %v62 = vperm.slane %v22, 5
    %v63 = vlaneseq
    %v64 = vshrl.u32 %v63, 7
    %66 = vset.pattern.permute.xlu0 %v64
    %67 = vperm.xlu0 %66, %v62
    %v68 = vpop.permute.xlu0 %67
    %v69 = vperm.slane %v22, 6
    %v70 = vlaneseq
    %v71 = vshrl.u32 %v70, 7
    %73 = vset.pattern.permute.xlu0 %v71
    %74 = vperm.xlu0 %73, %v69
    %v75 = vpop.permute.xlu0 %74
    %v76 = vperm.slane %v22, 7
    %v77 = vlaneseq
    %v78 = vshrl.u32 %v77, 7
    %80 = vset.pattern.permute.xlu0 %v78
    %81 = vperm.xlu0 %80, %v76
    %v82 = vpop.permute.xlu0 %81
    %vm83 = vcmp.eq.s32.totalorder %v33, %v26
    %vm84 = vcmp.eq.s32.totalorder %v40, %v26
    %vm85 = vcmp.eq.s32.totalorder %v47, %v26
    %vm86 = vcmp.eq.s32.totalorder %v54, %v26
    %vm87 = vcmp.eq.s32.totalorder %v61, %v26
    %vm88 = vcmp.eq.s32.totalorder %v68, %v26
    %vm89 = vcmp.eq.s32.totalorder %v75, %v26
    %vm90 = vcmp.eq.s32.totalorder %v82, %v26
    %v91 = vsel %vm83, 1, 0
    %v92 = vsel %vm84, 1, 0
    %v93 = vsel %vm85, 1, 0
    %v94 = vsel %vm86, 1, 0
    %v95 = vsel %vm87, 1, 0
    %v96 = vsel %vm88, 1, 0
    %v97 = vsel %vm89, 1, 0
    %v98 = vsel %vm90, 1, 0
    %v99 = vcvt.s32.f32 %v91
    %v100 = vcvt.s32.f32 %v92
    %v101 = vcvt.s32.f32 %v93
    %v102 = vcvt.s32.f32 %v94
    %v103 = vcvt.s32.f32 %v95
    %v104 = vcvt.s32.f32 %v96
    %v105 = vcvt.s32.f32 %v97
    %v106 = vcvt.s32.f32 %v98
    %vm107 = vcmask 523264
    %v108 = vsel %vm107, %v99, 0.0
    %v109 = vrot.slane %v108, 4
    %v110 = vadd.f32 %v108, %v109
    %v111 = vrot.slane %v110, 2
    %v112 = vadd.f32 %v110, %v111
    %v113 = vrot.slane %v112, 1
    %v114 = vadd.f32 %v112, %v113
    %v115 = vsel %vm107, %v100, 0.0
    %v116 = vrot.slane %v115, 4
    %v117 = vadd.f32 %v115, %v116
    %v118 = vrot.slane %v117, 2
    %v119 = vadd.f32 %v117, %v118
    %v120 = vrot.slane %v119, 1
    %v121 = vadd.f32 %v119, %v120
    %v122 = vsel %vm107, %v101, 0.0
    %v123 = vrot.slane %v122, 4
    %v124 = vadd.f32 %v122, %v123
    %v125 = vrot.slane %v124, 2
    %v126 = vadd.f32 %v124, %v125
    %v127 = vrot.slane %v126, 1
    %v128 = vadd.f32 %v126, %v127
    %v129 = vsel %vm107, %v102, 0.0
    %v130 = vrot.slane %v129, 4
    %v131 = vadd.f32 %v129, %v130
    %v132 = vrot.slane %v131, 2
    %v133 = vadd.f32 %v131, %v132
    %v134 = vrot.slane %v133, 1
    %v135 = vadd.f32 %v133, %v134
    %v136 = vsel %vm107, %v103, 0.0
    %v137 = vrot.slane %v136, 4
    %v138 = vadd.f32 %v136, %v137
    %v139 = vrot.slane %v138, 2
    %v140 = vadd.f32 %v138, %v139
    %v141 = vrot.slane %v140, 1
    %v142 = vadd.f32 %v140, %v141
    %v143 = vsel %vm107, %v104, 0.0
    %v144 = vrot.slane %v143, 4
    %v145 = vadd.f32 %v143, %v144
    %v146 = vrot.slane %v145, 2
    %v147 = vadd.f32 %v145, %v146
    %v148 = vrot.slane %v147, 1
    %v149 = vadd.f32 %v147, %v148
    %v150 = vsel %vm107, %v105, 0.0
    %v151 = vrot.slane %v150, 4
    %v152 = vadd.f32 %v150, %v151
    %v153 = vrot.slane %v152, 2
    %v154 = vadd.f32 %v152, %v153
    %v155 = vrot.slane %v154, 1
    %v156 = vadd.f32 %v154, %v155
    %v157 = vsel %vm107, %v106, 0.0
    %v158 = vrot.slane %v157, 4
    %v159 = vadd.f32 %v157, %v158
    %v160 = vrot.slane %v159, 2
    %v161 = vadd.f32 %v159, %v160
    %v162 = vrot.slane %v161, 1
    %v163 = vadd.f32 %v161, %v162
    %v164 = vsub.f32 8.0, %v24
    %vm165 = vcmp.eq.s32.totalorder %v26, 0
    %167 = vset.pattern.permute.xlu0 0
    %168 = vperm.xlu0 %167, %v164
    %v169 = vpop.permute.xlu0 %168
    %v171 = vsel %vm165, %v169, 0.0
    %v173 = vrot.slane %v171, 1
    %v174 = vrot.slane %v171, 2
    %v175 = vrot.slane %v171, 3
    %v176 = vrot.slane %v171, 4
    %v177 = vrot.slane %v171, 5
    %v178 = vrot.slane %v171, 6
    %v179 = vrot.slane %v171, 7
    %v188 = vsub.f32 %v114, %v171
    %v189 = vsub.f32 %v121, %v173
    %v190 = vsub.f32 %v128, %v174
    %v191 = vsub.f32 %v135, %v175
    %v192 = vsub.f32 %v142, %v176
    %v193 = vsub.f32 %v149, %v177
    %v194 = vsub.f32 %v156, %v178
    %v195 = vsub.f32 %v163, %v179
    %v196 = vpack.c.bf16 %v188, %v188
    %v197 = vpack.c.bf16 %v189, %v189
    %v198 = vpack.c.bf16 %v190, %v190
    %v199 = vpack.c.bf16 %v191, %v191
    %v200 = vpack.c.bf16 %v192, %v192
    %v201 = vpack.c.bf16 %v193, %v193
    %v202 = vpack.c.bf16 %v194, %v194
    %v203 = vpack.c.bf16 %v195, %v195
    %v204 = vld [vmem:[%s2] sm:$0xf]
    %v205 = vld [vmem:[%s2 + $0x4] sm:$0xf]
    %v206 = vld [vmem:[%s2 + $0x8] sm:$0xf]
    %v207 = vld [vmem:[%s2 + $0xc] sm:$0xf]
    %v208 = vld [vmem:[%s2 + $0x10] sm:$0xf]
    %v209 = vld [vmem:[%s2 + $0x14] sm:$0xf]
    %v210 = vld [vmem:[%s2 + $0x18] sm:$0xf]
    %v211 = vld [vmem:[%s2 + $0x1c] sm:$0xf]
    %v220 = vunpack.c.l.b16 %v196
    %v221 = vunpack.c.l.b16 %v197
    %v222 = vunpack.c.l.b16 %v198
    %v223 = vunpack.c.l.b16 %v199
    %v224 = vunpack.c.l.b16 %v200
    %v225 = vunpack.c.l.b16 %v201
    %v226 = vunpack.c.l.b16 %v202
    %v227 = vunpack.c.l.b16 %v203
    %v228 = vrot.slane %v221, 7
    %vm229 = vcmask 1041409
    %v230 = vsel %vm229, %v228, %v220
    %v231 = vrot.slane %v222, 6
    %vm232 = vcmask 1042434
    %v233 = vsel %vm232, %v231, %v230
    %v234 = vrot.slane %v223, 5
    %vm235 = vcmask 1043459
    %v236 = vsel %vm235, %v234, %v233
    %v237 = vrot.slane %v224, 4
    %vm238 = vcmask 1044484
    %v239 = vsel %vm238, %v237, %v236
    %v240 = vrot.slane %v225, 3
    %vm241 = vcmask 1045509
    %v242 = vsel %vm241, %v240, %v239
    %v243 = vrot.slane %v226, 2
    %vm244 = vcmask 1046534
    %v245 = vsel %vm244, %v243, %v242
    %v246 = vrot.slane %v227, 1
    %vm247 = vcmask 1047559
    %v248 = vsel %vm247, %v246, %v245
    %v249 = vpack.c.b16 %v248, %v248
    %v258 = vunpack.c.l.b16 %v204
    %v259 = vunpack.c.l.b16 %v205
    %v260 = vunpack.c.l.b16 %v206
    %v261 = vunpack.c.l.b16 %v207
    %v262 = vunpack.c.l.b16 %v208
    %v263 = vunpack.c.l.b16 %v209
    %v264 = vunpack.c.l.b16 %v210
    %v265 = vunpack.c.l.b16 %v211
    %v266 = vpack.c.b16 %v259, %v258
    %v267 = vpack.c.b16 %v261, %v260
    %v268 = vpack.c.b16 %v263, %v262
    %v269 = vpack.c.b16 %v265, %v264
    %v275 = vsel %vm107, %v249, 0
    %277 = vmatpush.bf16.msra.mxu0 0
    %278 = vmatpush.bf16.msra.mxu0 0
    %279 = vmatpush.bf16.msra.mxu0 0
    %280 = vmatpush.bf16.msra.mxu0 0
    %281 = vmatpush.bf16.msra.mxu0 %v269
    %282 = vmatpush.bf16.msra.mxu0 %v268
    %283 = vmatpush.bf16.msra.mxu0 %v267
    %284 = vmatpush.bf16.msra.mxu0 %v266
    %285 = vmatmul.bf16.gmra.mxu0 %v275
    %v286 = vpop.f32.mrf.mxu0
    %v287 = vadd.f32 0.0, %v286
    %v288 = vpop.f32.mrf.mxu0
    %289 = vdwg.mxu0
    %v290 = vmax.f32 %v24, 1.0
    %v291 = vrcp.pop %v290
    %vm292 = vcmp.gt.f32.partialorder %v24, 0.0
    %294 = vset.pattern.permute.xlu0 0
    %295 = vperm.xlu0 %294, %v291
    %v296 = vpop.permute.xlu0 %295
    %v298 = vmul.f32 %v287, %v296
    %v299 = vsel %vm292, 1, 0
    %300 = vset.pattern.permute.xlu0 0
    %301 = vperm.xlu0 %300, %v299
    %v302 = vpop.permute.xlu0 %301
    %vm303 = vcmp.eq.s32.totalorder %v302, 1
    %v304 = vsel %vm303, %v298, 0.0
    %v305 = vtanh.pop %v304
    %v306 = vpack.c.bf16 %v305, %v305
    %v307 = vld [vmem:[%s3] sm:$0xf]
    %v308 = vld [vmem:[%s3 + $0x4] sm:$0xf]
    %v309 = vld [vmem:[%s3 + $0x8] sm:$0xf]
    %v310 = vld [vmem:[%s3 + $0xc] sm:$0xf]
    %v311 = vld [vmem:[%s4] sm:$0x1]
    %v313 = vperm.slane %v311, 0
    %v319 = vunpack.c.l.b16 %v307
    %v320 = vunpack.c.l.b16 %v308
    %v321 = vunpack.c.l.b16 %v309
    %v322 = vunpack.c.l.b16 %v310
    %v323 = vpack.c.b16 %v320, %v319
    %v324 = vpack.c.b16 %v322, %v321
    %vm327 = vcmask 261120
    %v329 = vsel %vm327, %v306, 0
    %331 = vmatpush.bf16.msra.mxu0 0
    %332 = vmatpush.bf16.msra.mxu0 0
    %333 = vmatpush.bf16.msra.mxu0 0
    %334 = vmatpush.bf16.msra.mxu0 0
    %335 = vmatpush.bf16.msra.mxu0 0
    %336 = vmatpush.bf16.msra.mxu0 0
    %337 = vmatpush.bf16.msra.mxu0 %v324
    %338 = vmatpush.bf16.msra.mxu0 %v323
    %339 = vmatmul.bf16.gmra.mxu0 %v329
    %v340 = vpop.f32.mrf.mxu0
    %v341 = vadd.f32 %v313, %v340
    %v342 = vpop.f32.mrf.mxu0
    %343 = vdwg.mxu0
    %344 = vst [vmem:[#allocation2] sm:$0xff] %v341
    // Predicated region
    $region22: #{tpu_custom_call.1} parent=1 // pred_check
      _
    $region23: #{tpu_custom_call.1} parent=1 // pred_check_branch
      %346 = sbr.rel (0) target = $region25
    $region24: #{tpu_custom_call.1} parent=1 // pred_region
      %348 = vsyncadd [#allocation3], 0
      %s350 = sshll.u32 [#allocation2], 4
      %s351 = int_to_ptr.vmem [resolvable:$true] %s350
      %s352 = sshll.u32 %s5, 4
      %s353 = int_to_ptr.hbm [resolvable:$true] %s352
      %355 = dma.vmem_to_hbm [thread:$0]  %s351, 128, %s353, [#allocation3]
    $region25: #{tpu_custom_call.1} parent=1 // pred_fallthru
      _
    // Predicated region
    $region26: #{tpu_custom_call.1} parent=1 // pred_check
      _
    $region27: #{tpu_custom_call.1} parent=1 // pred_check_branch
      %357 = sbr.rel (0) target = $region29
    $region28: #{tpu_custom_call.1} parent=1 // pred_region
      %359 = dma.done [#allocation3], 128
    $region29: #{tpu_custom_call.1} parent=1 // pred_fallthru
      _
    %360 = vsyncpa [#allocation3], 1

</llo_original>
